<compile_context>
chip_gen: v7x
topology: tpu7x:2x2x1
jax: 0.10.0
libtpu: 0.0.40
codegen_flags: <defaults>
</compile_context>

<pallas_src>
import jax
import jax.numpy as jnp
from jax.experimental import pallas as pl
from jax.experimental.pallas import tpu as pltpu

NEG_SLOPE = 0.2      # GATConv default negative_slope
MASK_VAL = -1e30     # "-inf" for masked (non-edge / cross-graph) attention logits


def _gat_layer(h_in, adj_pos, w, a_src, a_dst, b):
    """One dense GATConv layer (heads=1, concat=True), fully in VMEM.

    h_in: [M, Fin], adj_pos: [M, M] bool, w: [Fin, D], a_src/a_dst/b: [1, D].
    """
    h = jnp.dot(h_in, w, preferred_element_type=jnp.float32)              # [M, D]  (MXU)
    # logits[i, j] = a_dst . h_i + a_src . h_j  (rank-1 -> never form it on the MXU)
    e_dst = jnp.sum(h * a_dst, axis=-1, keepdims=True)                    # [M, 1]  (VPU + lane reduce)
    e_src = jax.lax.dot_general(a_src, h, (((1,), (1,)), ((), ())),
                                preferred_element_type=jnp.float32)       # [1, M]  (tiny matvec)
    logits = e_dst + e_src                                                # [M, M]
    logits = jnp.maximum(logits, NEG_SLOPE * logits)                      # LeakyReLU(0.2)
    logits = jnp.where(adj_pos, logits, MASK_VAL)                         # mask non-edges (once)
    m = jnp.max(logits, axis=-1, keepdims=True)
    p = jnp.exp(logits - m)                 # masked entries underflow to exactly 0.0
    alpha = p / jnp.sum(p, axis=-1, keepdims=True)                        # exact softmax per dst node
    return jnp.dot(alpha, h, preferred_element_type=jnp.float32) + b      # [M, D]  (MXU)


def gat_net_kernel(x_ref, adj_ref, w1_ref, v1_ref, w2_ref, v2_ref, out_ref):
    """Whole batch in one grid step. x: [B*N, F], adj: block-diagonal [B*N, B*N]."""
    adj_pos = adj_ref[...] > 0.0            # computed once, reused by both layers

    # gat1 + relu
    v1 = v1_ref[...]                        # [3, H]: rows = (a_src1, a_dst1, b1)
    h = _gat_layer(x_ref[...], adj_pos, w1_ref[...], v1[0:1, :], v1[1:2, :], v1[2:3, :])
    h = jnp.maximum(h, 0.0)                 # F.relu
    # F.dropout(x, training=self.training): inference mode -> identity.
    # TODO(synk): training-mode dropout would use pltpu.prng_seed / pltpu.prng_random_bits.

    # gat2
    v2 = v2_ref[...]                        # [3, C]: rows = (a_src2, a_dst2, b2)
    h = _gat_layer(h, adj_pos, w2_ref[...], v2[0:1, :], v2[1:2, :], v2[2:3, :])

    # log_softmax over the class axis
    m = jnp.max(h, axis=-1, keepdims=True)
    z = h - m
    lse = jnp.log(jnp.sum(jnp.exp(z), axis=-1, keepdims=True))
    out_ref[...] = z - lse


def gat_net_forward(x, adj, params):
    """x: [B, N, F] node features, adj: [B, N, N] dense edge mask (dst <- src)."""
    b_, n, f_in = x.shape
    c = params["w2"].shape[1]
    m = b_ * n

    # Hard input contract for the masked softmax: every row needs a finite logit.
    adj = jnp.maximum(adj, jnp.eye(n, dtype=adj.dtype)[None])             # add_self_loops=True

    # Fold the batch into the node axis: block-diagonal adjacency.
    x_flat = x.reshape(m, f_in)
    adj_bd = jnp.zeros((b_, n, b_, n), adj.dtype)
    adj_bd = adj_bd.at[jnp.arange(b_), :, jnp.arange(b_), :].set(adj)
    adj_bd = adj_bd.reshape(m, m)

    # Pack the tiny per-layer vectors into one operand per layer: [3, D].
    v1 = jnp.concatenate([params["a_src1"], params["a_dst1"], params["b1"]], axis=0)
    v2 = jnp.concatenate([params["a_src2"], params["a_dst2"], params["b2"]], axis=0)

    vmem = pl.BlockSpec(memory_space=pltpu.MemorySpace.VMEM)              # whole array, VMEM
    out = pl.pallas_call(
        gat_net_kernel,
        out_shape=jax.ShapeDtypeStruct((m, c), jnp.float32),
        in_specs=[vmem] * 6,
        out_specs=vmem,
    )(x_flat, adj_bd, params["w1"], v1, params["w2"], v2)
    return out.reshape(b_, n, c)


# ----------------------------- pure-JAX reference -----------------------------
_HI = jax.lax.Precision.HIGHEST  # full-f32 matmuls so the reference matches kernel precision


def _ref_layer(h_in, adj, w, a_src, a_dst, b):
    h = jnp.dot(h_in, w, precision=_HI)
    e_d = jnp.sum(h * a_dst, axis=-1)                                     # [N]
    e_s = jnp.sum(h * a_src, axis=-1)                                     # [N]
    logits = e_d[:, None] + e_s[None, :]
    logits = jnp.where(logits > 0, logits, NEG_SLOPE * logits)
    logits = jnp.where(adj > 0, logits, MASK_VAL)
    m = jnp.max(logits, axis=-1, keepdims=True)
    p = jnp.exp(logits - m)
    p = jnp.where(adj > 0, p, 0.0)
    alpha = p / jnp.sum(p, axis=-1, keepdims=True)
    return jnp.dot(alpha, h, precision=_HI) + b


def ref_forward_single(x, adj, params):
    adj = jnp.maximum(adj, jnp.eye(adj.shape[0], dtype=adj.dtype))
    h = _ref_layer(x, adj, params["w1"], params["a_src1"], params["a_dst1"], params["b1"])
    h = jnp.maximum(h, 0.0)
    h = _ref_layer(h, adj, params["w2"], params["a_src2"], params["a_dst2"], params["b2"])
    return jax.nn.log_softmax(h, axis=1)


# ------------------------------------ main ------------------------------------
if __name__ == "__main__":
    key = jax.random.PRNGKey(0)
    B, N, F_IN, HIDDEN, CLASSES, HEADS, E = 4, 16, 8, 16, 4, 1, 40

    keys = jax.random.split(key, 12)

    # node features for B independent graphs
    x = jax.random.normal(keys[0], (B, N, F_IN), dtype=jnp.float32)

    # random edge_index ([2, E] per graph: row0 = src, row1 = dst) -> dense adjacency mask
    src = jax.random.randint(keys[1], (B, E), 0, N)
    dst = jax.random.randint(keys[2], (B, E), 0, N)
    batch_idx = jnp.repeat(jnp.arange(B), E)
    adj = jnp.zeros((B, N, N), dtype=jnp.float32)
    adj = adj.at[batch_idx, dst.reshape(-1), src.reshape(-1)].set(1.0)
    adj = jnp.maximum(adj, jnp.eye(N, dtype=jnp.float32)[None])           # add_self_loops=True

    def glorot(k, shape):
        fan_in, fan_out = shape[0], shape[-1]
        scale = jnp.sqrt(2.0 / (fan_in + fan_out))
        return (scale * jax.random.normal(k, shape)).astype(jnp.float32)

    params = {
        # GATConv(features -> hidden, heads=1)
        "w1":     glorot(keys[3], (F_IN, HIDDEN * HEADS)),
        "a_src1": glorot(keys[4], (1, HIDDEN * HEADS)),
        "a_dst1": glorot(keys[5], (1, HIDDEN * HEADS)),
        "b1":     jnp.zeros((1, HIDDEN * HEADS), dtype=jnp.float32),
        # GATConv(hidden*heads -> classes)
        "w2":     glorot(keys[6], (HIDDEN * HEADS, CLASSES)),
        "a_src2": glorot(keys[7], (1, CLASSES)),
        "a_dst2": glorot(keys[8], (1, CLASSES)),
        "b2":     jnp.zeros((1, CLASSES), dtype=jnp.float32),
    }

    out = gat_net_forward(x, adj, params)
    out = jax.block_until_ready(out)

    ref = jax.vmap(lambda xb, ab: ref_forward_single(xb, ab, params))(x, adj)
    assert out.shape == (B, N, CLASSES)
    assert jnp.allclose(out, ref, rtol=1e-3, atol=1e-3), "Pallas kernel mismatch vs reference"

    print("KERNEL_OK")
</pallas_src>

<mosaic_0001>
module attributes {stable_mosaic.version = 11 : i64} {
  func.func @gat_net_kernel(%arg0: memref<64x8xf32, #tpu.memory_space<vmem>>, %arg1: memref<64x64xf32, #tpu.memory_space<vmem>>, %arg2: memref<8x16xf32, #tpu.memory_space<vmem>>, %arg3: memref<3x16xf32, #tpu.memory_space<vmem>>, %arg4: memref<16x4xf32, #tpu.memory_space<vmem>>, %arg5: memref<3x4xf32, #tpu.memory_space<vmem>>, %arg6: memref<64x4xf32, #tpu.memory_space<vmem>>) attributes {dimension_semantics = [], scalar_prefetch = 0 : i64, scratch_operands = 0 : i64, tpu.core_type = #tpu.core_type<tc>} {
    %c0 = arith.constant 0 : index
    %c0_0 = arith.constant 0 : index
    %0 = vector.load %arg1[%c0, %c0_0] : memref<64x64xf32, #tpu.memory_space<vmem>>, vector<64x64xf32>
    %cst = arith.constant 0.000000e+00 : f32
    %1 = vector.broadcast %cst : f32 to vector<64x64xf32>
    %2 = arith.cmpf ogt, %0, %1 : vector<64x64xf32>
    %c0_1 = arith.constant 0 : index
    %c0_2 = arith.constant 0 : index
    %3 = vector.load %arg3[%c0_1, %c0_2] : memref<3x16xf32, #tpu.memory_space<vmem>>, vector<3x16xf32>
    %c0_3 = arith.constant 0 : index
    %c0_4 = arith.constant 0 : index
    %4 = vector.load %arg0[%c0_3, %c0_4] : memref<64x8xf32, #tpu.memory_space<vmem>>, vector<64x8xf32>
    %c0_5 = arith.constant 0 : index
    %c0_6 = arith.constant 0 : index
    %5 = vector.load %arg2[%c0_5, %c0_6] : memref<8x16xf32, #tpu.memory_space<vmem>>, vector<8x16xf32>
    %6 = vector.extract_strided_slice %3 {offsets = [0, 0], sizes = [1, 16], strides = [1, 1]} : vector<3x16xf32> to vector<1x16xf32>
    %7 = vector.extract_strided_slice %3 {offsets = [1, 0], sizes = [1, 16], strides = [1, 1]} : vector<3x16xf32> to vector<1x16xf32>
    %8 = vector.extract_strided_slice %3 {offsets = [2, 0], sizes = [1, 16], strides = [1, 1]} : vector<3x16xf32> to vector<1x16xf32>
    %cst_7 = arith.constant dense<0.000000e+00> : vector<64x16xf32>
    %9 = tpu.matmul %4, %5, %cst_7 {dimension_numbers = #tpu.dot_dimension_numbers<[1], [0], [0], [1], [0, 0, 1, 1], [], []>} : vector<64x8xf32>, vector<8x16xf32>, vector<64x16xf32> -> vector<64x16xf32>
    %10 = vector.broadcast %7 : vector<1x16xf32> to vector<64x16xf32>
    %11 = arith.mulf %9, %10 : vector<64x16xf32>
    %cst_8 = arith.constant dense<0.000000e+00> : vector<64xf32>
    %12 = vector.multi_reduction <add>, %11, %cst_8 [1] : vector<64x16xf32> to vector<64xf32>
    %13 = vector.shape_cast %12 : vector<64xf32> to vector<64x1xf32>
    %cst_9 = arith.constant dense<0.000000e+00> : vector<1x64xf32>
    %14 = tpu.matmul %6, %9, %cst_9 {dimension_numbers = #tpu.dot_dimension_numbers<[1], [1], [0], [0], [0, 0, 1, 0], [], []>} : vector<1x16xf32>, vector<64x16xf32>, vector<1x64xf32> -> vector<1x64xf32>
    %15 = vector.broadcast %13 : vector<64x1xf32> to vector<64x64xf32>
    %16 = vector.broadcast %14 : vector<1x64xf32> to vector<64x64xf32>
    %17 = arith.addf %15, %16 : vector<64x64xf32>
    %cst_10 = arith.constant 2.000000e-01 : f32
    %18 = vector.broadcast %cst_10 : f32 to vector<64x64xf32>
    %19 = arith.mulf %18, %17 : vector<64x64xf32>
    %20 = arith.maximumf %17, %19 : vector<64x64xf32>
    %cst_11 = arith.constant -1.000000e+30 : f32
    %21 = vector.broadcast %cst_11 : f32 to vector<64x64xf32>
    %22 = arith.select %2, %20, %21 : vector<64x64xi1>, vector<64x64xf32>
    %cst_12 = arith.constant dense<0xFF800000> : vector<64xf32>
    %23 = vector.multi_reduction <maximumf>, %22, %cst_12 [1] : vector<64x64xf32> to vector<64xf32>
    %24 = vector.shape_cast %23 : vector<64xf32> to vector<64x1xf32>
    %25 = vector.broadcast %24 : vector<64x1xf32> to vector<64x64xf32>
    %26 = arith.subf %22, %25 : vector<64x64xf32>
    %27 = math.exp %26 : vector<64x64xf32>
    %cst_13 = arith.constant dense<0.000000e+00> : vector<64xf32>
    %28 = vector.multi_reduction <add>, %27, %cst_13 [1] : vector<64x64xf32> to vector<64xf32>
    %29 = vector.shape_cast %28 : vector<64xf32> to vector<64x1xf32>
    %30 = vector.broadcast %29 : vector<64x1xf32> to vector<64x64xf32>
    %31 = arith.divf %27, %30 : vector<64x64xf32>
    %cst_14 = arith.constant dense<0.000000e+00> : vector<64x16xf32>
    %32 = tpu.matmul %31, %9, %cst_14 {dimension_numbers = #tpu.dot_dimension_numbers<[1], [0], [0], [1], [0, 0, 1, 1], [], []>} : vector<64x64xf32>, vector<64x16xf32>, vector<64x16xf32> -> vector<64x16xf32>
    %33 = vector.broadcast %8 : vector<1x16xf32> to vector<64x16xf32>
    %34 = arith.addf %32, %33 : vector<64x16xf32>
    %cst_15 = arith.constant 0.000000e+00 : f32
    %35 = vector.broadcast %cst_15 : f32 to vector<64x16xf32>
    %36 = arith.maximumf %34, %35 : vector<64x16xf32>
    %c0_16 = arith.constant 0 : index
    %c0_17 = arith.constant 0 : index
    %37 = vector.load %arg5[%c0_16, %c0_17] : memref<3x4xf32, #tpu.memory_space<vmem>>, vector<3x4xf32>
    %c0_18 = arith.constant 0 : index
    %c0_19 = arith.constant 0 : index
    %38 = vector.load %arg4[%c0_18, %c0_19] : memref<16x4xf32, #tpu.memory_space<vmem>>, vector<16x4xf32>
    %39 = vector.extract_strided_slice %37 {offsets = [0, 0], sizes = [1, 4], strides = [1, 1]} : vector<3x4xf32> to vector<1x4xf32>
    %40 = vector.extract_strided_slice %37 {offsets = [1, 0], sizes = [1, 4], strides = [1, 1]} : vector<3x4xf32> to vector<1x4xf32>
    %41 = vector.extract_strided_slice %37 {offsets = [2, 0], sizes = [1, 4], strides = [1, 1]} : vector<3x4xf32> to vector<1x4xf32>
    %cst_20 = arith.constant dense<0.000000e+00> : vector<64x4xf32>
    %42 = tpu.matmul %36, %38, %cst_20 {dimension_numbers = #tpu.dot_dimension_numbers<[1], [0], [0], [1], [0, 0, 1, 1], [], []>} : vector<64x16xf32>, vector<16x4xf32>, vector<64x4xf32> -> vector<64x4xf32>
    %43 = vector.broadcast %40 : vector<1x4xf32> to vector<64x4xf32>
    %44 = arith.mulf %42, %43 : vector<64x4xf32>
    %cst_21 = arith.constant dense<0.000000e+00> : vector<64xf32>
    %45 = vector.multi_reduction <add>, %44, %cst_21 [1] : vector<64x4xf32> to vector<64xf32>
    %46 = vector.shape_cast %45 : vector<64xf32> to vector<64x1xf32>
    %cst_22 = arith.constant dense<0.000000e+00> : vector<1x64xf32>
    %47 = tpu.matmul %39, %42, %cst_22 {dimension_numbers = #tpu.dot_dimension_numbers<[1], [1], [0], [0], [0, 0, 1, 0], [], []>} : vector<1x4xf32>, vector<64x4xf32>, vector<1x64xf32> -> vector<1x64xf32>
    %48 = vector.broadcast %46 : vector<64x1xf32> to vector<64x64xf32>
    %49 = vector.broadcast %47 : vector<1x64xf32> to vector<64x64xf32>
    %50 = arith.addf %48, %49 : vector<64x64xf32>
    %cst_23 = arith.constant 2.000000e-01 : f32
    %51 = vector.broadcast %cst_23 : f32 to vector<64x64xf32>
    %52 = arith.mulf %51, %50 : vector<64x64xf32>
    %53 = arith.maximumf %50, %52 : vector<64x64xf32>
    %cst_24 = arith.constant -1.000000e+30 : f32
    %54 = vector.broadcast %cst_24 : f32 to vector<64x64xf32>
    %55 = arith.select %2, %53, %54 : vector<64x64xi1>, vector<64x64xf32>
    %cst_25 = arith.constant dense<0xFF800000> : vector<64xf32>
    %56 = vector.multi_reduction <maximumf>, %55, %cst_25 [1] : vector<64x64xf32> to vector<64xf32>
    %57 = vector.shape_cast %56 : vector<64xf32> to vector<64x1xf32>
    %58 = vector.broadcast %57 : vector<64x1xf32> to vector<64x64xf32>
    %59 = arith.subf %55, %58 : vector<64x64xf32>
    %60 = math.exp %59 : vector<64x64xf32>
    %cst_26 = arith.constant dense<0.000000e+00> : vector<64xf32>
    %61 = vector.multi_reduction <add>, %60, %cst_26 [1] : vector<64x64xf32> to vector<64xf32>
    %62 = vector.shape_cast %61 : vector<64xf32> to vector<64x1xf32>
    %63 = vector.broadcast %62 : vector<64x1xf32> to vector<64x64xf32>
    %64 = arith.divf %60, %63 : vector<64x64xf32>
    %cst_27 = arith.constant dense<0.000000e+00> : vector<64x4xf32>
    %65 = tpu.matmul %64, %42, %cst_27 {dimension_numbers = #tpu.dot_dimension_numbers<[1], [0], [0], [1], [0, 0, 1, 1], [], []>} : vector<64x64xf32>, vector<64x4xf32>, vector<64x4xf32> -> vector<64x4xf32>
    %66 = vector.broadcast %41 : vector<1x4xf32> to vector<64x4xf32>
    %67 = arith.addf %65, %66 : vector<64x4xf32>
    %cst_28 = arith.constant dense<0xFF800000> : vector<64xf32>
    %68 = vector.multi_reduction <maximumf>, %67, %cst_28 [1] : vector<64x4xf32> to vector<64xf32>
    %69 = vector.shape_cast %68 : vector<64xf32> to vector<64x1xf32>
    %70 = vector.broadcast %69 : vector<64x1xf32> to vector<64x4xf32>
    %71 = arith.subf %67, %70 : vector<64x4xf32>
    %72 = math.exp %71 : vector<64x4xf32>
    %cst_29 = arith.constant dense<0.000000e+00> : vector<64xf32>
    %73 = vector.multi_reduction <add>, %72, %cst_29 [1] : vector<64x4xf32> to vector<64xf32>
    %74 = vector.shape_cast %73 : vector<64xf32> to vector<64x1xf32>
    %75 = math.log %74 : vector<64x1xf32>
    %76 = vector.broadcast %75 : vector<64x1xf32> to vector<64x4xf32>
    %77 = arith.subf %71, %76 : vector<64x4xf32>
    %c0_30 = arith.constant 0 : index
    %c0_31 = arith.constant 0 : index
    %78 = vector.load %arg6[%c0_30, %c0_31] : memref<64x4xf32, #tpu.memory_space<vmem>>, vector<64x4xf32>
    tpu.vector_store %arg6[%c0_30, %c0_31], %77 {strides = array<i32>} : memref<64x4xf32, #tpu.memory_space<vmem>>, vector<64x4xf32>,
    return
  }
}

</mosaic_0001>

<llo_original>
// kernel: tpu_custom_call.1
$region0: #{tpu_custom_call.1}
  #allocation0 [shape = 'u32[]', space=smem, size = 0x4, offset = 0x4, fixed_abs, tag = 'smem constant byte address 0x4 - core index']
  #allocation1 [shape = 'u32[144,128]{1,0:T(1,128)}', space=vmem, size = 0x12000, scoped, tag = 'internal scratch']
  %s0 = inlined_call_operand.vmem [shape: f32[64,8], index: 0, kind: input, shape index: {}]
  %s1 = inlined_call_operand.vmem [shape: f32[64,64], index: 1, kind: input, shape index: {}]
  %s2 = inlined_call_operand.vmem [shape: f32[8,16], index: 2, kind: input, shape index: {}]
  %s3 = inlined_call_operand.vmem [shape: f32[3,16], index: 3, kind: input, shape index: {}]
  %s4 = inlined_call_operand.vmem [shape: f32[16,4], index: 4, kind: input, shape index: {}]
  %s5 = inlined_call_operand.vmem [shape: f32[3,4], index: 5, kind: input, shape index: {}]
  %s6 = inlined_call_operand.vmem [shape: f32[64,4], index: 6, kind: output, shape index: {}]
  %s7 = sld [smem:[#allocation0]]
  $region34: #{tpu_custom_call.1} parent=0
    _
  %s9 = ssub.s32 1, %s7
  %s10 = scalar_select 0, %s9, %s7
  // Predicated region
  $region2: #{tpu_custom_call.1} parent=0 // pred_check
    _
  $region3: #{tpu_custom_call.1} parent=0 // pred_check_branch
    %12 = sbr.rel (0) target = $region5
  $region4: #{tpu_custom_call.1} parent=0 // pred_region
    _
  $region5: #{tpu_custom_call.1} parent=0 // pred_fallthru
    _
  // Predicated region
  $region6: #{tpu_custom_call.1} parent=0 // pred_check
    _
  $region7: #{tpu_custom_call.1} parent=0 // pred_check_branch
    %14 = sbr.rel (0) target = $region9
  $region8: #{tpu_custom_call.1} parent=0 // pred_region
    _
  $region9: #{tpu_custom_call.1} parent=0 // pred_fallthru
    _
  // Predicated region
  $region10: #{tpu_custom_call.1} parent=0 // pred_check
    _
  $region11: #{tpu_custom_call.1} parent=0 // pred_check_branch
    %16 = sbr.rel (0) target = $region13
  $region12: #{tpu_custom_call.1} parent=0 // pred_region
    _
  $region13: #{tpu_custom_call.1} parent=0 // pred_fallthru
    _
  // Predicated region
  $region14: #{tpu_custom_call.1} parent=0 // pred_check
    _
  $region15: #{tpu_custom_call.1} parent=0 // pred_check_branch
    %18 = sbr.rel (0) target = $region17
  $region16: #{tpu_custom_call.1} parent=0 // pred_region
    _
  $region17: #{tpu_custom_call.1} parent=0 // pred_fallthru
    _
  // Predicated region
  $region18: #{tpu_custom_call.1} parent=0 // pred_check
    _
  $region19: #{tpu_custom_call.1} parent=0 // pred_check_branch
    %20 = sbr.rel (0) target = $region21
  $region20: #{tpu_custom_call.1} parent=0 // pred_region
    _
  $region21: #{tpu_custom_call.1} parent=0 // pred_fallthru
    _
  // Predicated region
  $region22: #{tpu_custom_call.1} parent=0 // pred_check
    _
  $region23: #{tpu_custom_call.1} parent=0 // pred_check_branch
    %22 = sbr.rel (0) target = $region25
  $region24: #{tpu_custom_call.1} parent=0 // pred_region
    _
  $region25: #{tpu_custom_call.1} parent=0 // pred_fallthru
    _
  %v23 = vld [vmem:[%s1] sm:$0xff]
  %v24 = vld [vmem:[%s1 + $0x8] sm:$0xff]
  %v25 = vld [vmem:[%s1 + $0x10] sm:$0xff]
  %v26 = vld [vmem:[%s1 + $0x18] sm:$0xff]
  %v27 = vld [vmem:[%s1 + $0x20] sm:$0xff]
  %v28 = vld [vmem:[%s1 + $0x28] sm:$0xff]
  %v29 = vld [vmem:[%s1 + $0x30] sm:$0xff]
  %v30 = vld [vmem:[%s1 + $0x38] sm:$0xff]
  %vm31 = vcmp.gt.f32.partialorder %v23, 0.0
  %vm32 = vcmp.gt.f32.partialorder %v24, 0.0
  %vm33 = vcmp.gt.f32.partialorder %v25, 0.0
  %vm34 = vcmp.gt.f32.partialorder %v26, 0.0
  %vm35 = vcmp.gt.f32.partialorder %v27, 0.0
  %vm36 = vcmp.gt.f32.partialorder %v28, 0.0
  %vm37 = vcmp.gt.f32.partialorder %v29, 0.0
  %vm38 = vcmp.gt.f32.partialorder %v30, 0.0
  %v39 = vld [vmem:[%s3] sm:$0x7]
  %v40 = vld [vmem:[%s0] sm:$0xff]
  %v41 = vld [vmem:[%s0 + $0x8] sm:$0xff]
  %v42 = vld [vmem:[%s0 + $0x10] sm:$0xff]
  %v43 = vld [vmem:[%s0 + $0x18] sm:$0xff]
  %v44 = vld [vmem:[%s0 + $0x20] sm:$0xff]
  %v45 = vld [vmem:[%s0 + $0x28] sm:$0xff]
  %v46 = vld [vmem:[%s0 + $0x30] sm:$0xff]
  %v47 = vld [vmem:[%s0 + $0x38] sm:$0xff]
  %v48 = vld [vmem:[%s2] sm:$0xff]
  %vm49 = vcmask 64512
  %v51 = vsel %vm49, %v40, 0
  %v54 = vsel %vm49, %v41, 0
  %v57 = vsel %vm49, %v42, 0
  %v60 = vsel %vm49, %v43, 0
  %v63 = vsel %vm49, %v44, 0
  %v66 = vsel %vm49, %v45, 0
  %v69 = vsel %vm49, %v46, 0
  %v72 = vsel %vm49, %v47, 0
  %74 = vmatprep.subr.mxu0 0.0
  %75 = vmatpush1.msra.mxu0 %v48
  %76 = vmatprep.subr.mxu0 0.0
  %77 = vmatpush1.msra.mxu0 0.0
  %78 = vmatprep.subr.mxu0 0.0
  %79 = vmatpush1.msra.mxu0 0.0
  %80 = vmatprep.subr.mxu0 0.0
  %81 = vmatpush1.msra.mxu0 0.0
  %82 = vmatprep.subr.mxu0 0.0
  %83 = vmatpush1.msra.mxu0 0.0
  %84 = vmatprep.subr.mxu0 0.0
  %85 = vmatpush1.msra.mxu0 0.0
  %86 = vmatprep.subr.mxu0 0.0
  %87 = vmatpush1.msra.mxu0 0.0
  %88 = vmatprep.subr.mxu0 0.0
  %89 = vmatpush1.msra.mxu0 0.0
  %90 = vmatprep.subr.mxu0 0.0
  %91 = vmatpush1.msra.mxu0 0.0
  %92 = vmatprep.subr.mxu0 0.0
  %93 = vmatpush1.msra.mxu0 0.0
  %94 = vmatprep.subr.mxu0 0.0
  %95 = vmatpush1.msra.mxu0 0.0
  %96 = vmatprep.subr.mxu0 0.0
  %97 = vmatpush1.msra.mxu0 0.0
  %98 = vmatprep.subr.mxu0 0.0
  %99 = vmatpush1.msra.mxu0 0.0
  %100 = vmatprep.subr.mxu0 0.0
  %101 = vmatpush1.msra.mxu0 0.0
  %102 = vmatprep.subr.mxu0 0.0
  %103 = vmatpush1.msra.mxu0 0.0
  %104 = vmatprep.subr.mxu0 0.0
  %105 = vmatpush1.msra.mxu0 0.0
  %106 = vmatprep.subr.mxu0 0.0
  %107 = vmatpush1.msra.mxu0 0.0
  %108 = vmatprep.subr.mxu0 0.0
  %109 = vmatpush1.msra.mxu0 0.0
  %110 = vmatprep.subr.mxu0 0.0
  %111 = vmatpush1.msra.mxu0 0.0
  %112 = vmatprep.subr.mxu0 0.0
  %113 = vmatpush1.msra.mxu0 0.0
  %114 = vmatprep.subr.mxu0 0.0
  %115 = vmatpush1.msra.mxu0 0.0
  %116 = vmatprep.subr.mxu0 0.0
  %117 = vmatpush1.msra.mxu0 0.0
  %118 = vmatprep.subr.mxu0 0.0
  %119 = vmatpush1.msra.mxu0 0.0
  %120 = vmatprep.subr.mxu0 0.0
  %121 = vmatpush1.msra.mxu0 0.0
  %122 = vmatprep.subr.mxu0 0.0
  %123 = vmatpush1.msra.mxu0 0.0
  %124 = vmatprep.subr.mxu0 0.0
  %125 = vmatpush1.msra.mxu0 0.0
  %126 = vmatprep.subr.mxu0 0.0
  %127 = vmatpush1.msra.mxu0 0.0
  %128 = vmatprep.subr.mxu0 0.0
  %129 = vmatpush1.msra.mxu0 0.0
  %130 = vmatprep.subr.mxu0 0.0
  %131 = vmatpush1.msra.mxu0 0.0
  %132 = vmatprep.subr.mxu0 0.0
  %133 = vmatpush1.msra.mxu0 0.0
  %134 = vmatprep.subr.mxu0 0.0
  %135 = vmatpush1.msra.mxu0 0.0
  %136 = vmatprep.subr.mxu0 0.0
  %137 = vmatpush1.msra.mxu0 0.0
  %138 = vmatprep.mubr.f32.mxu0 0.0
  %139 = vmatmul.mubr.f32.gmra.mrb[0].mxu0 %v51
  %v140 = vpop.f32.mrb[0].mxu0
  %v141 = vadd.f32 0.0, %v140
  %v142 = vpop.f32.mrb[0].mxu0
  %143 = vmatprep.mubr.f32.mxu0 0.0
  %144 = vmatmul.mubr.f32.gmra.mrb[0].mxu0 %v54
  %v145 = vpop.f32.mrb[0].mxu0
  %v146 = vadd.f32 0.0, %v145
  %v147 = vpop.f32.mrb[0].mxu0
  %148 = vmatprep.mubr.f32.mxu0 0.0
  %149 = vmatmul.mubr.f32.gmra.mrb[0].mxu0 %v57
  %v150 = vpop.f32.mrb[0].mxu0
  %v151 = vadd.f32 0.0, %v150
  %v152 = vpop.f32.mrb[0].mxu0
  %153 = vmatprep.mubr.f32.mxu0 0.0
  %154 = vmatmul.mubr.f32.gmra.mrb[0].mxu0 %v60
  %v155 = vpop.f32.mrb[0].mxu0
  %v156 = vadd.f32 0.0, %v155
  %v157 = vpop.f32.mrb[0].mxu0
  %158 = vmatprep.mubr.f32.mxu0 0.0
  %159 = vmatmul.mubr.f32.gmra.mrb[0].mxu0 %v63
  %v160 = vpop.f32.mrb[0].mxu0
  %v161 = vadd.f32 0.0, %v160
  %v162 = vpop.f32.mrb[0].mxu0
  %163 = vmatprep.mubr.f32.mxu0 0.0
  %164 = vmatmul.mubr.f32.gmra.mrb[0].mxu0 %v66
  %v165 = vpop.f32.mrb[0].mxu0
  %v166 = vadd.f32 0.0, %v165
  %v167 = vpop.f32.mrb[0].mxu0
  %168 = vmatprep.mubr.f32.mxu0 0.0
  %169 = vmatmul.mubr.f32.gmra.mrb[0].mxu0 %v69
  %v170 = vpop.f32.mrb[0].mxu0
  %v171 = vadd.f32 0.0, %v170
  %v172 = vpop.f32.mrb[0].mxu0
  %173 = vmatprep.mubr.f32.mxu0 0.0
  %174 = vmatmul.mubr.f32.gmra.mrb[0].mxu0 %v72
  %v175 = vpop.f32.mrb[0].mxu0
  %v176 = vadd.f32 0.0, %v175
  %v177 = vpop.f32.mrb[0].mxu0
  %178 = vdwg.mxu0
  %v179 = vlaneseq
  %v180 = vshrl.u32 %v179, 7
  %v181 = vsub.s32 1, %v180
  %v182 = vrot.slane %v39, %v181
  %v183 = vmul.f32 %v141, %v182
  %v184 = vmul.f32 %v146, %v182
  %v185 = vmul.f32 %v151, %v182
  %v186 = vmul.f32 %v156, %v182
  %v187 = vmul.f32 %v161, %v182
  %v188 = vmul.f32 %v166, %v182
  %v189 = vmul.f32 %v171, %v182
  %v190 = vmul.f32 %v176, %v182
  %vm191 = vcmask 130048
  %v192 = vsel %vm191, %v183, 0.0
  %193 = vadd.xlane.f32.xlu0 %v192
  %v194 = vpop.xlane.xlu0 %193
  %v195 = vsel %vm191, %v184, 0.0
  %196 = vadd.xlane.f32.xlu0 %v195
  %v197 = vpop.xlane.xlu0 %196
  %v198 = vsel %vm191, %v185, 0.0
  %199 = vadd.xlane.f32.xlu0 %v198
  %v200 = vpop.xlane.xlu0 %199
  %v201 = vsel %vm191, %v186, 0.0
  %202 = vadd.xlane.f32.xlu0 %v201
  %v203 = vpop.xlane.xlu0 %202
  %v204 = vsel %vm191, %v187, 0.0
  %205 = vadd.xlane.f32.xlu0 %v204
  %v206 = vpop.xlane.xlu0 %205
  %v207 = vsel %vm191, %v188, 0.0
  %208 = vadd.xlane.f32.xlu0 %v207
  %v209 = vpop.xlane.xlu0 %208
  %v210 = vsel %vm191, %v189, 0.0
  %211 = vadd.xlane.f32.xlu0 %v210
  %v212 = vpop.xlane.xlu0 %211
  %v213 = vsel %vm191, %v190, 0.0
  %214 = vadd.xlane.f32.xlu0 %v213
  %v215 = vpop.xlane.xlu0 %214
  %v217 = vsel %vm191, %v39, 0
  %v220 = vsel %vm191, %v141, 0
  %v223 = vsel %vm191, %v146, 0
  %v226 = vsel %vm191, %v151, 0
  %v229 = vsel %vm191, %v156, 0
  %v232 = vsel %vm191, %v161, 0
  %v235 = vsel %vm191, %v166, 0
  %v238 = vsel %vm191, %v171, 0
  %v241 = vsel %vm191, %v176, 0
  %243 = vmatprep.subr.mxu0 0.0
  %244 = vmatpush1.xpose.msra.mxu0 %v220
  %245 = vmatprep.subr.mxu0 0.0
  %246 = vmatpush1.xpose.msra.mxu0 %v223
  %247 = vmatprep.subr.mxu0 0.0
  %248 = vmatpush1.xpose.msra.mxu0 %v226
  %249 = vmatprep.subr.mxu0 0.0
  %250 = vmatpush1.xpose.msra.mxu0 %v229
  %251 = vmatprep.subr.mxu0 0.0
  %252 = vmatpush1.xpose.msra.mxu0 %v232
  %253 = vmatprep.subr.mxu0 0.0
  %254 = vmatpush1.xpose.msra.mxu0 %v235
  %255 = vmatprep.subr.mxu0 0.0
  %256 = vmatpush1.xpose.msra.mxu0 %v238
  %257 = vmatprep.subr.mxu0 0.0
  %258 = vmatpush1.xpose.msra.mxu0 %v241
  %259 = vmatprep.subr.mxu0 0.0
  %260 = vmatpush1.xpose.msra.mxu0 0.0
  %261 = vmatprep.subr.mxu0 0.0
  %262 = vmatpush1.xpose.msra.mxu0 0.0
  %263 = vmatprep.subr.mxu0 0.0
  %264 = vmatpush1.xpose.msra.mxu0 0.0
  %265 = vmatprep.subr.mxu0 0.0
  %266 = vmatpush1.xpose.msra.mxu0 0.0
  %267 = vmatprep.subr.mxu0 0.0
  %268 = vmatpush1.xpose.msra.mxu0 0.0
  %269 = vmatprep.subr.mxu0 0.0
  %270 = vmatpush1.xpose.msra.mxu0 0.0
  %271 = vmatprep.subr.mxu0 0.0
  %272 = vmatpush1.xpose.msra.mxu0 0.0
  %273 = vmatprep.subr.mxu0 0.0
  %274 = vmatpush1.xpose.msra.mxu0 0.0
  %275 = vmatprep.subr.mxu0 0.0
  %276 = vmatpush1.xpose.msra.mxu0 0.0
  %277 = vmatprep.subr.mxu0 0.0
  %278 = vmatpush1.xpose.msra.mxu0 0.0
  %279 = vmatprep.subr.mxu0 0.0
  %280 = vmatpush1.xpose.msra.mxu0 0.0
  %281 = vmatprep.subr.mxu0 0.0
  %282 = vmatpush1.xpose.msra.mxu0 0.0
  %283 = vmatprep.subr.mxu0 0.0
  %284 = vmatpush1.xpose.msra.mxu0 0.0
  %285 = vmatprep.subr.mxu0 0.0
  %286 = vmatpush1.xpose.msra.mxu0 0.0
  %287 = vmatprep.subr.mxu0 0.0
  %288 = vmatpush1.xpose.msra.mxu0 0.0
  %289 = vmatprep.subr.mxu0 0.0
  %290 = vmatpush1.xpose.msra.mxu0 0.0
  %291 = vmatprep.subr.mxu0 0.0
  %292 = vmatpush1.xpose.msra.mxu0 0.0
  %293 = vmatprep.subr.mxu0 0.0
  %294 = vmatpush1.xpose.msra.mxu0 0.0
  %295 = vmatprep.subr.mxu0 0.0
  %296 = vmatpush1.xpose.msra.mxu0 0.0
  %297 = vmatprep.subr.mxu0 0.0
  %298 = vmatpush1.xpose.msra.mxu0 0.0
  %299 = vmatprep.subr.mxu0 0.0
  %300 = vmatpush1.xpose.msra.mxu0 0.0
  %301 = vmatprep.subr.mxu0 0.0
  %302 = vmatpush1.xpose.msra.mxu0 0.0
  %303 = vmatprep.subr.mxu0 0.0
  %304 = vmatpush1.xpose.msra.mxu0 0.0
  %305 = vmatprep.subr.mxu0 0.0
  %306 = vmatpush1.xpose.msra.mxu0 0.0
  %307 = vmatprep.mubr.f32.mxu0 0.0
  %308 = vmatmul.mubr.f32.gmra.mrb[0].mxu0 %v217
  %v309 = vpop.f32.mrb[0].mxu0
  %v310 = vadd.f32 0.0, %v309
  %v311 = vpop.f32.mrb[0].mxu0
  %312 = vdwg.mxu0
  %v313 = vlaneseq
  %v314 = vshrl.u32 %v313, 7
  %v315 = vsub.s32 0, %v314
  %v316 = vrot.slane %v310, %v315
  %v317 = vadd.f32 %v194, %v316
  %v318 = vadd.f32 %v197, %v316
  %v319 = vadd.f32 %v200, %v316
  %v320 = vadd.f32 %v203, %v316
  %v321 = vadd.f32 %v206, %v316
  %v322 = vadd.f32 %v209, %v316
  %v323 = vadd.f32 %v212, %v316
  %v324 = vadd.f32 %v215, %v316
  %v325 = vmul.f32 %v317, 0.2
  %v326 = vmul.f32 %v318, 0.2
  %v327 = vmul.f32 %v319, 0.2
  %v328 = vmul.f32 %v320, 0.2
  %v329 = vmul.f32 %v321, 0.2
  %v330 = vmul.f32 %v322, 0.2
  %v331 = vmul.f32 %v323, 0.2
  %v332 = vmul.f32 %v324, 0.2
  %v333 = vmax.f32 %v317, %v325
  %v334 = vmax.f32 %v318, %v326
  %v335 = vmax.f32 %v319, %v327
  %v336 = vmax.f32 %v320, %v328
  %v337 = vmax.f32 %v321, %v329
  %v338 = vmax.f32 %v322, %v330
  %v339 = vmax.f32 %v323, %v331
  %v340 = vmax.f32 %v324, %v332
  %v341 = vsel %vm31, %v333, -1e+30
  %v342 = vsel %vm32, %v334, -1e+30
  %v343 = vsel %vm33, %v335, -1e+30
  %v344 = vsel %vm34, %v336, -1e+30
  %v345 = vsel %vm35, %v337, -1e+30
  %v346 = vsel %vm36, %v338, -1e+30
  %v347 = vsel %vm37, %v339, -1e+30
  %v348 = vsel %vm38, %v340, -1e+30
  %vm349 = vcmask 523264
  %v350 = vsel %vm349, %v341, -inf
  %351 = vmax.xlane.f32.xlu0 %v350
  %v352 = vpop.xlane.xlu0 %351
  %v353 = vsel %vm349, %v342, -inf
  %354 = vmax.xlane.f32.xlu0 %v353
  %v355 = vpop.xlane.xlu0 %354
  %v356 = vsel %vm349, %v343, -inf
  %357 = vmax.xlane.f32.xlu0 %v356
  %v358 = vpop.xlane.xlu0 %357
  %v359 = vsel %vm349, %v344, -inf
  %360 = vmax.xlane.f32.xlu0 %v359
  %v361 = vpop.xlane.xlu0 %360
  %v362 = vsel %vm349, %v345, -inf
  %363 = vmax.xlane.f32.xlu0 %v362
  %v364 = vpop.xlane.xlu0 %363
  %v365 = vsel %vm349, %v346, -inf
  %366 = vmax.xlane.f32.xlu0 %v365
  %v367 = vpop.xlane.xlu0 %366
  %v368 = vsel %vm349, %v347, -inf
  %369 = vmax.xlane.f32.xlu0 %v368
  %v370 = vpop.xlane.xlu0 %369
  %v371 = vsel %vm349, %v348, -inf
  %372 = vmax.xlane.f32.xlu0 %v371
  %v373 = vpop.xlane.xlu0 %372
  %v374 = vsub.f32 %v341, %v352
  %v375 = vsub.f32 %v342, %v355
  %v376 = vsub.f32 %v343, %v358
  %v377 = vsub.f32 %v344, %v361
  %v378 = vsub.f32 %v345, %v364
  %v379 = vsub.f32 %v346, %v367
  %v380 = vsub.f32 %v347, %v370
  %v381 = vsub.f32 %v348, %v373
  %v382 = vmul.f32 %v374, 1.442695
  %v383 = vpow.pop %v382
  %v384 = vmul.f32 %v375, 1.442695
  %v385 = vpow.pop %v384
  %v386 = vmul.f32 %v376, 1.442695
  %v387 = vpow.pop %v386
  %v388 = vmul.f32 %v377, 1.442695
  %v389 = vpow.pop %v388
  %v390 = vmul.f32 %v378, 1.442695
  %v391 = vpow.pop %v390
  %v392 = vmul.f32 %v379, 1.442695
  %v393 = vpow.pop %v392
  %v394 = vmul.f32 %v380, 1.442695
  %v395 = vpow.pop %v394
  %v396 = vmul.f32 %v381, 1.442695
  %v397 = vpow.pop %v396
  %v398 = vsel %vm349, %v383, 0.0
  %399 = vadd.xlane.f32.xlu0 %v398
  %v400 = vpop.xlane.xlu0 %399
  %v401 = vsel %vm349, %v385, 0.0
  %402 = vadd.xlane.f32.xlu0 %v401
  %v403 = vpop.xlane.xlu0 %402
  %v404 = vsel %vm349, %v387, 0.0
  %405 = vadd.xlane.f32.xlu0 %v404
  %v406 = vpop.xlane.xlu0 %405
  %v407 = vsel %vm349, %v389, 0.0
  %408 = vadd.xlane.f32.xlu0 %v407
  %v409 = vpop.xlane.xlu0 %408
  %v410 = vsel %vm349, %v391, 0.0
  %411 = vadd.xlane.f32.xlu0 %v410
  %v412 = vpop.xlane.xlu0 %411
  %v413 = vsel %vm349, %v393, 0.0
  %414 = vadd.xlane.f32.xlu0 %v413
  %v415 = vpop.xlane.xlu0 %414
  %v416 = vsel %vm349, %v395, 0.0
  %417 = vadd.xlane.f32.xlu0 %v416
  %v418 = vpop.xlane.xlu0 %417
  %v419 = vsel %vm349, %v397, 0.0
  %420 = vadd.xlane.f32.xlu0 %v419
  %v421 = vpop.xlane.xlu0 %420
  %v422 = vrcp.pop %v400
  %v423 = vmul.f32 %v383, %v422
  %v424 = vrcp.pop %v403
  %v425 = vmul.f32 %v385, %v424
  %v426 = vrcp.pop %v406
  %v427 = vmul.f32 %v387, %v426
  %v428 = vrcp.pop %v409
  %v429 = vmul.f32 %v389, %v428
  %v430 = vrcp.pop %v412
  %v431 = vmul.f32 %v391, %v430
  %v432 = vrcp.pop %v415
  %v433 = vmul.f32 %v393, %v432
  %v434 = vrcp.pop %v418
  %v435 = vmul.f32 %v395, %v434
  %v436 = vrcp.pop %v421
  %v437 = vmul.f32 %v397, %v436
  %v438 = vlaneseq
  %v439 = vshrl.u32 %v438, 7
  %v440 = vsub.s32 2, %v439
  %v441 = vrot.slane %v39, %v440
  %v443 = vsel %vm349, %v423, 0
  %v446 = vsel %vm349, %v425, 0
  %v449 = vsel %vm349, %v427, 0
  %v452 = vsel %vm349, %v429, 0
  %v455 = vsel %vm349, %v431, 0
  %v458 = vsel %vm349, %v433, 0
  %v461 = vsel %vm349, %v435, 0
  %v464 = vsel %vm349, %v437, 0
  %466 = vmatprep.subr.mxu0 0.0
  %467 = vmatpush1.msra.mxu0 %v141
  %468 = vmatprep.subr.mxu0 0.0
  %469 = vmatpush1.msra.mxu0 %v146
  %470 = vmatprep.subr.mxu0 0.0
  %471 = vmatpush1.msra.mxu0 %v151
  %472 = vmatprep.subr.mxu0 0.0
  %473 = vmatpush1.msra.mxu0 %v156
  %474 = vmatprep.subr.mxu0 0.0
  %475 = vmatpush1.msra.mxu0 %v161
  %476 = vmatprep.subr.mxu0 0.0
  %477 = vmatpush1.msra.mxu0 %v166
  %478 = vmatprep.subr.mxu0 0.0
  %479 = vmatpush1.msra.mxu0 %v171
  %480 = vmatprep.subr.mxu0 0.0
  %481 = vmatpush1.msra.mxu0 %v176
  %482 = vmatprep.subr.mxu0 0.0
  %483 = vmatpush1.msra.mxu0 0.0
  %484 = vmatprep.subr.mxu0 0.0
  %485 = vmatpush1.msra.mxu0 0.0
  %486 = vmatprep.subr.mxu0 0.0
  %487 = vmatpush1.msra.mxu0 0.0
  %488 = vmatprep.subr.mxu0 0.0
  %489 = vmatpush1.msra.mxu0 0.0
  %490 = vmatprep.subr.mxu0 0.0
  %491 = vmatpush1.msra.mxu0 0.0
  %492 = vmatprep.subr.mxu0 0.0
  %493 = vmatpush1.msra.mxu0 0.0
  %494 = vmatprep.subr.mxu0 0.0
  %495 = vmatpush1.msra.mxu0 0.0
  %496 = vmatprep.subr.mxu0 0.0
  %497 = vmatpush1.msra.mxu0 0.0
  %498 = vmatprep.subr.mxu0 0.0
  %499 = vmatpush1.msra.mxu0 0.0
  %500 = vmatprep.subr.mxu0 0.0
  %501 = vmatpush1.msra.mxu0 0.0
  %502 = vmatprep.subr.mxu0 0.0
  %503 = vmatpush1.msra.mxu0 0.0
  %504 = vmatprep.subr.mxu0 0.0
  %505 = vmatpush1.msra.mxu0 0.0
  %506 = vmatprep.subr.mxu0 0.0
  %507 = vmatpush1.msra.mxu0 0.0
  %508 = vmatprep.subr.mxu0 0.0
  %509 = vmatpush1.msra.mxu0 0.0
  %510 = vmatprep.subr.mxu0 0.0
  %511 = vmatpush1.msra.mxu0 0.0
  %512 = vmatprep.subr.mxu0 0.0
  %513 = vmatpush1.msra.mxu0 0.0
  %514 = vmatprep.subr.mxu0 0.0
  %515 = vmatpush1.msra.mxu0 0.0
  %516 = vmatprep.subr.mxu0 0.0
  %517 = vmatpush1.msra.mxu0 0.0
  %518 = vmatprep.subr.mxu0 0.0
  %519 = vmatpush1.msra.mxu0 0.0
  %520 = vmatprep.subr.mxu0 0.0
  %521 = vmatpush1.msra.mxu0 0.0
  %522 = vmatprep.subr.mxu0 0.0
  %523 = vmatpush1.msra.mxu0 0.0
  %524 = vmatprep.subr.mxu0 0.0
  %525 = vmatpush1.msra.mxu0 0.0
  %526 = vmatprep.subr.mxu0 0.0
  %527 = vmatpush1.msra.mxu0 0.0
  %528 = vmatprep.subr.mxu0 0.0
  %529 = vmatpush1.msra.mxu0 0.0
  %530 = vmatprep.mubr.f32.mxu0 0.0
  %531 = vmatmul.mubr.f32.gmra.mrb[0].mxu0 %v443
  %v532 = vpop.f32.mrb[0].mxu0
  %v533 = vadd.f32 %v441, %v532
  %v534 = vpop.f32.mrb[0].mxu0
  %535 = vmatprep.mubr.f32.mxu0 0.0
  %536 = vmatmul.mubr.f32.gmra.mrb[0].mxu0 %v446
  %v537 = vpop.f32.mrb[0].mxu0
  %v538 = vadd.f32 %v441, %v537
  %v539 = vpop.f32.mrb[0].mxu0
  %540 = vmatprep.mubr.f32.mxu0 0.0
  %541 = vmatmul.mubr.f32.gmra.mrb[0].mxu0 %v449
  %v542 = vpop.f32.mrb[0].mxu0
  %v543 = vadd.f32 %v441, %v542
  %v544 = vpop.f32.mrb[0].mxu0
  %545 = vmatprep.mubr.f32.mxu0 0.0
  %546 = vmatmul.mubr.f32.gmra.mrb[0].mxu0 %v452
  %v547 = vpop.f32.mrb[0].mxu0
  %v548 = vadd.f32 %v441, %v547
  %v549 = vpop.f32.mrb[0].mxu0
  %550 = vmatprep.mubr.f32.mxu0 0.0
  %551 = vmatmul.mubr.f32.gmra.mrb[0].mxu0 %v455
  %v552 = vpop.f32.mrb[0].mxu0
  %v553 = vadd.f32 %v441, %v552
  %v554 = vpop.f32.mrb[0].mxu0
  %555 = vmatprep.mubr.f32.mxu0 0.0
  %556 = vmatmul.mubr.f32.gmra.mrb[0].mxu0 %v458
  %v557 = vpop.f32.mrb[0].mxu0
  %v558 = vadd.f32 %v441, %v557
  %v559 = vpop.f32.mrb[0].mxu0
  %560 = vmatprep.mubr.f32.mxu0 0.0
  %561 = vmatmul.mubr.f32.gmra.mrb[0].mxu0 %v461
  %v562 = vpop.f32.mrb[0].mxu0
  %v563 = vadd.f32 %v441, %v562
  %v564 = vpop.f32.mrb[0].mxu0
  %565 = vmatprep.mubr.f32.mxu0 0.0
  %566 = vmatmul.mubr.f32.gmra.mrb[0].mxu0 %v464
  %v567 = vpop.f32.mrb[0].mxu0
  %v568 = vadd.f32 %v441, %v567
  %v569 = vpop.f32.mrb[0].mxu0
  %570 = vdwg.mxu0
  %v571 = vmax.f32 %v533, 0.0
  %v572 = vmax.f32 %v538, 0.0
  %v573 = vmax.f32 %v543, 0.0
  %v574 = vmax.f32 %v548, 0.0
  %v575 = vmax.f32 %v553, 0.0
  %v576 = vmax.f32 %v558, 0.0
  %v577 = vmax.f32 %v563, 0.0
  %v578 = vmax.f32 %v568, 0.0
  %v579 = vld [vmem:[%s5] sm:$0x7]
  %v580 = vld [vmem:[%s4] sm:$0xff]
  %v581 = vld [vmem:[%s4 + $0x8] sm:$0xff]
  %v583 = vsel %vm191, %v571, 0
  %v586 = vsel %vm191, %v572, 0
  %v589 = vsel %vm191, %v573, 0
  %v592 = vsel %vm191, %v574, 0
  %v595 = vsel %vm191, %v575, 0
  %v598 = vsel %vm191, %v576, 0
  %v601 = vsel %vm191, %v577, 0
  %v604 = vsel %vm191, %v578, 0
  %606 = vmatprep.subr.mxu0 0.0
  %607 = vmatpush1.msra.mxu0 %v580
  %608 = vmatprep.subr.mxu0 0.0
  %609 = vmatpush1.msra.mxu0 %v581
  %610 = vmatprep.subr.mxu0 0.0
  %611 = vmatpush1.msra.mxu0 0.0
  %612 = vmatprep.subr.mxu0 0.0
  %613 = vmatpush1.msra.mxu0 0.0
  %614 = vmatprep.subr.mxu0 0.0
  %615 = vmatpush1.msra.mxu0 0.0
  %616 = vmatprep.subr.mxu0 0.0
  %617 = vmatpush1.msra.mxu0 0.0
  %618 = vmatprep.subr.mxu0 0.0
  %619 = vmatpush1.msra.mxu0 0.0
  %620 = vmatprep.subr.mxu0 0.0
  %621 = vmatpush1.msra.mxu0 0.0
  %622 = vmatprep.subr.mxu0 0.0
  %623 = vmatpush1.msra.mxu0 0.0
  %624 = vmatprep.subr.mxu0 0.0
  %625 = vmatpush1.msra.mxu0 0.0
  %626 = vmatprep.subr.mxu0 0.0
  %627 = vmatpush1.msra.mxu0 0.0
  %628 = vmatprep.subr.mxu0 0.0
  %629 = vmatpush1.msra.mxu0 0.0
  %630 = vmatprep.subr.mxu0 0.0
  %631 = vmatpush1.msra.mxu0 0.0
  %632 = vmatprep.subr.mxu0 0.0
  %633 = vmatpush1.msra.mxu0 0.0
  %634 = vmatprep.subr.mxu0 0.0
  %635 = vmatpush1.msra.mxu0 0.0
  %636 = vmatprep.subr.mxu0 0.0
  %637 = vmatpush1.msra.mxu0 0.0
  %638 = vmatprep.subr.mxu0 0.0
  %639 = vmatpush1.msra.mxu0 0.0
  %640 = vmatprep.subr.mxu0 0.0
  %641 = vmatpush1.msra.mxu0 0.0
  %642 = vmatprep.subr.mxu0 0.0
  %643 = vmatpush1.msra.mxu0 0.0
  %644 = vmatprep.subr.mxu0 0.0
  %645 = vmatpush1.msra.mxu0 0.0
  %646 = vmatprep.subr.mxu0 0.0
  %647 = vmatpush1.msra.mxu0 0.0
  %648 = vmatprep.subr.mxu0 0.0
  %649 = vmatpush1.msra.mxu0 0.0
  %650 = vmatprep.subr.mxu0 0.0
  %651 = vmatpush1.msra.mxu0 0.0
  %652 = vmatprep.subr.mxu0 0.0
  %653 = vmatpush1.msra.mxu0 0.0
  %654 = vmatprep.subr.mxu0 0.0
  %655 = vmatpush1.msra.mxu0 0.0
  %656 = vmatprep.subr.mxu0 0.0
  %657 = vmatpush1.msra.mxu0 0.0
  %658 = vmatprep.subr.mxu0 0.0
  %659 = vmatpush1.msra.mxu0 0.0
  %660 = vmatprep.subr.mxu0 0.0
  %661 = vmatpush1.msra.mxu0 0.0
  %662 = vmatprep.subr.mxu0 0.0
  %663 = vmatpush1.msra.mxu0 0.0
  %664 = vmatprep.subr.mxu0 0.0
  %665 = vmatpush1.msra.mxu0 0.0
  %666 = vmatprep.subr.mxu0 0.0
  %667 = vmatpush1.msra.mxu0 0.0
  %668 = vmatprep.subr.mxu0 0.0
  %669 = vmatpush1.msra.mxu0 0.0
  %670 = vmatprep.mubr.f32.mxu0 0.0
  %671 = vmatmul.mubr.f32.gmra.mrb[0].mxu0 %v583
  %v672 = vpop.f32.mrb[0].mxu0
  %v673 = vadd.f32 0.0, %v672
  %v674 = vpop.f32.mrb[0].mxu0
  %675 = vmatprep.mubr.f32.mxu0 0.0
  %676 = vmatmul.mubr.f32.gmra.mrb[0].mxu0 %v586
  %v677 = vpop.f32.mrb[0].mxu0
  %v678 = vadd.f32 0.0, %v677
  %v679 = vpop.f32.mrb[0].mxu0
  %680 = vmatprep.mubr.f32.mxu0 0.0
  %681 = vmatmul.mubr.f32.gmra.mrb[0].mxu0 %v589
  %v682 = vpop.f32.mrb[0].mxu0
  %v683 = vadd.f32 0.0, %v682
  %v684 = vpop.f32.mrb[0].mxu0
  %685 = vmatprep.mubr.f32.mxu0 0.0
  %686 = vmatmul.mubr.f32.gmra.mrb[0].mxu0 %v592
  %v687 = vpop.f32.mrb[0].mxu0
  %v688 = vadd.f32 0.0, %v687
  %v689 = vpop.f32.mrb[0].mxu0
  %690 = vmatprep.mubr.f32.mxu0 0.0
  %691 = vmatmul.mubr.f32.gmra.mrb[0].mxu0 %v595
  %v692 = vpop.f32.mrb[0].mxu0
  %v693 = vadd.f32 0.0, %v692
  %v694 = vpop.f32.mrb[0].mxu0
  %695 = vmatprep.mubr.f32.mxu0 0.0
  %696 = vmatmul.mubr.f32.gmra.mrb[0].mxu0 %v598
  %v697 = vpop.f32.mrb[0].mxu0
  %v698 = vadd.f32 0.0, %v697
  %v699 = vpop.f32.mrb[0].mxu0
  %700 = vmatprep.mubr.f32.mxu0 0.0
  %701 = vmatmul.mubr.f32.gmra.mrb[0].mxu0 %v601
  %v702 = vpop.f32.mrb[0].mxu0
  %v703 = vadd.f32 0.0, %v702
  %v704 = vpop.f32.mrb[0].mxu0
  %705 = vmatprep.mubr.f32.mxu0 0.0
  %706 = vmatmul.mubr.f32.gmra.mrb[0].mxu0 %v604
  %v707 = vpop.f32.mrb[0].mxu0
  %v708 = vadd.f32 0.0, %v707
  %v709 = vpop.f32.mrb[0].mxu0
  %710 = vdwg.mxu0
  %v711 = vlaneseq
  %v712 = vshrl.u32 %v711, 7
  %v713 = vsub.s32 1, %v712
  %v714 = vrot.slane %v579, %v713
  %v715 = vmul.f32 %v673, %v714
  %v716 = vmul.f32 %v678, %v714
  %v717 = vmul.f32 %v683, %v714
  %v718 = vmul.f32 %v688, %v714
  %v719 = vmul.f32 %v693, %v714
  %v720 = vmul.f32 %v698, %v714
  %v721 = vmul.f32 %v703, %v714
  %v722 = vmul.f32 %v708, %v714
  %vm723 = vcmask 31744
  %v724 = vsel %vm723, %v715, 0.0
  %725 = vadd.xlane.f32.xlu0 %v724
  %v726 = vpop.xlane.xlu0 %725
  %v727 = vsel %vm723, %v716, 0.0
  %728 = vadd.xlane.f32.xlu0 %v727
  %v729 = vpop.xlane.xlu0 %728
  %v730 = vsel %vm723, %v717, 0.0
  %731 = vadd.xlane.f32.xlu0 %v730
  %v732 = vpop.xlane.xlu0 %731
  %v733 = vsel %vm723, %v718, 0.0
  %734 = vadd.xlane.f32.xlu0 %v733
  %v735 = vpop.xlane.xlu0 %734
  %v736 = vsel %vm723, %v719, 0.0
  %737 = vadd.xlane.f32.xlu0 %v736
  %v738 = vpop.xlane.xlu0 %737
  %v739 = vsel %vm723, %v720, 0.0
  %740 = vadd.xlane.f32.xlu0 %v739
  %v741 = vpop.xlane.xlu0 %740
  %v742 = vsel %vm723, %v721, 0.0
  %743 = vadd.xlane.f32.xlu0 %v742
  %v744 = vpop.xlane.xlu0 %743
  %v745 = vsel %vm723, %v722, 0.0
  %746 = vadd.xlane.f32.xlu0 %v745
  %v747 = vpop.xlane.xlu0 %746
  %v749 = vsel %vm723, %v579, 0
  %v752 = vsel %vm723, %v673, 0
  %v755 = vsel %vm723, %v678, 0
  %v758 = vsel %vm723, %v683, 0
  %v761 = vsel %vm723, %v688, 0
  %v764 = vsel %vm723, %v693, 0
  %v767 = vsel %vm723, %v698, 0
  %v770 = vsel %vm723, %v703, 0
  %v773 = vsel %vm723, %v708, 0
  %775 = vmatprep.subr.mxu0 0.0
  %776 = vmatpush1.xpose.msra.mxu0 %v752
  %777 = vmatprep.subr.mxu0 0.0
  %778 = vmatpush1.xpose.msra.mxu0 %v755
  %779 = vmatprep.subr.mxu0 0.0
  %780 = vmatpush1.xpose.msra.mxu0 %v758
  %781 = vmatprep.subr.mxu0 0.0
  %782 = vmatpush1.xpose.msra.mxu0 %v761
  %783 = vmatprep.subr.mxu0 0.0
  %784 = vmatpush1.xpose.msra.mxu0 %v764
  %785 = vmatprep.subr.mxu0 0.0
  %786 = vmatpush1.xpose.msra.mxu0 %v767
  %787 = vmatprep.subr.mxu0 0.0
  %788 = vmatpush1.xpose.msra.mxu0 %v770
  %789 = vmatprep.subr.mxu0 0.0
  %790 = vmatpush1.xpose.msra.mxu0 %v773
  %791 = vmatprep.subr.mxu0 0.0
  %792 = vmatpush1.xpose.msra.mxu0 0.0
  %793 = vmatprep.subr.mxu0 0.0
  %794 = vmatpush1.xpose.msra.mxu0 0.0
  %795 = vmatprep.subr.mxu0 0.0
  %796 = vmatpush1.xpose.msra.mxu0 0.0
  %797 = vmatprep.subr.mxu0 0.0
  %798 = vmatpush1.xpose.msra.mxu0 0.0
  %799 = vmatprep.subr.mxu0 0.0
  %800 = vmatpush1.xpose.msra.mxu0 0.0
  %801 = vmatprep.subr.mxu0 0.0
  %802 = vmatpush1.xpose.msra.mxu0 0.0
  %803 = vmatprep.subr.mxu0 0.0
  %804 = vmatpush1.xpose.msra.mxu0 0.0
  %805 = vmatprep.subr.mxu0 0.0
  %806 = vmatpush1.xpose.msra.mxu0 0.0
  %807 = vmatprep.subr.mxu0 0.0
  %808 = vmatpush1.xpose.msra.mxu0 0.0
  %809 = vmatprep.subr.mxu0 0.0
  %810 = vmatpush1.xpose.msra.mxu0 0.0
  %811 = vmatprep.subr.mxu0 0.0
  %812 = vmatpush1.xpose.msra.mxu0 0.0
  %813 = vmatprep.subr.mxu0 0.0
  %814 = vmatpush1.xpose.msra.mxu0 0.0
  %815 = vmatprep.subr.mxu0 0.0
  %816 = vmatpush1.xpose.msra.mxu0 0.0
  %817 = vmatprep.subr.mxu0 0.0
  %818 = vmatpush1.xpose.msra.mxu0 0.0
  %819 = vmatprep.subr.mxu0 0.0
  %820 = vmatpush1.xpose.msra.mxu0 0.0
  %821 = vmatprep.subr.mxu0 0.0
  %822 = vmatpush1.xpose.msra.mxu0 0.0
  %823 = vmatprep.subr.mxu0 0.0
  %824 = vmatpush1.xpose.msra.mxu0 0.0
  %825 = vmatprep.subr.mxu0 0.0
  %826 = vmatpush1.xpose.msra.mxu0 0.0
  %827 = vmatprep.subr.mxu0 0.0
  %828 = vmatpush1.xpose.msra.mxu0 0.0
  %829 = vmatprep.subr.mxu0 0.0
  %830 = vmatpush1.xpose.msra.mxu0 0.0
  %831 = vmatprep.subr.mxu0 0.0
  %832 = vmatpush1.xpose.msra.mxu0 0.0
  %833 = vmatprep.subr.mxu0 0.0
  %834 = vmatpush1.xpose.msra.mxu0 0.0
  %835 = vmatprep.subr.mxu0 0.0
  %836 = vmatpush1.xpose.msra.mxu0 0.0
  %837 = vmatprep.subr.mxu0 0.0
  %838 = vmatpush1.xpose.msra.mxu0 0.0
  %839 = vmatprep.mubr.f32.mxu0 0.0
  %840 = vmatmul.mubr.f32.gmra.mrb[0].mxu0 %v749
  %v841 = vpop.f32.mrb[0].mxu0
  %v842 = vadd.f32 0.0, %v841
  %v843 = vpop.f32.mrb[0].mxu0
  %844 = vdwg.mxu0
  %v845 = vlaneseq
  %v846 = vshrl.u32 %v845, 7
  %v847 = vsub.s32 0, %v846
  %v848 = vrot.slane %v842, %v847
  %v849 = vadd.f32 %v726, %v848
  %v850 = vadd.f32 %v729, %v848
  %v851 = vadd.f32 %v732, %v848
  %v852 = vadd.f32 %v735, %v848
  %v853 = vadd.f32 %v738, %v848
  %v854 = vadd.f32 %v741, %v848
  %v855 = vadd.f32 %v744, %v848
  %v856 = vadd.f32 %v747, %v848
  %v857 = vmul.f32 %v849, 0.2
  %v858 = vmul.f32 %v850, 0.2
  %v859 = vmul.f32 %v851, 0.2
  %v860 = vmul.f32 %v852, 0.2
  %v861 = vmul.f32 %v853, 0.2
  %v862 = vmul.f32 %v854, 0.2
  %v863 = vmul.f32 %v855, 0.2
  %v864 = vmul.f32 %v856, 0.2
  %v865 = vmax.f32 %v849, %v857
  %v866 = vmax.f32 %v850, %v858
  %v867 = vmax.f32 %v851, %v859
  %v868 = vmax.f32 %v852, %v860
  %v869 = vmax.f32 %v853, %v861
  %v870 = vmax.f32 %v854, %v862
  %v871 = vmax.f32 %v855, %v863
  %v872 = vmax.f32 %v856, %v864
  %v873 = vsel %vm31, %v865, -1e+30
  %v874 = vsel %vm32, %v866, -1e+30
  %v875 = vsel %vm33, %v867, -1e+30
  %v876 = vsel %vm34, %v868, -1e+30
  %v877 = vsel %vm35, %v869, -1e+30
  %v878 = vsel %vm36, %v870, -1e+30
  %v879 = vsel %vm37, %v871, -1e+30
  %v880 = vsel %vm38, %v872, -1e+30
  %v881 = vsel %vm349, %v873, -inf
  %882 = vmax.xlane.f32.xlu0 %v881
  %v883 = vpop.xlane.xlu0 %882
  %v884 = vsel %vm349, %v874, -inf
  %885 = vmax.xlane.f32.xlu0 %v884
  %v886 = vpop.xlane.xlu0 %885
  %v887 = vsel %vm349, %v875, -inf
  %888 = vmax.xlane.f32.xlu0 %v887
  %v889 = vpop.xlane.xlu0 %888
  %v890 = vsel %vm349, %v876, -inf
  %891 = vmax.xlane.f32.xlu0 %v890
  %v892 = vpop.xlane.xlu0 %891
  %v893 = vsel %vm349, %v877, -inf
  %894 = vmax.xlane.f32.xlu0 %v893
  %v895 = vpop.xlane.xlu0 %894
  %v896 = vsel %vm349, %v878, -inf
  %897 = vmax.xlane.f32.xlu0 %v896
  %v898 = vpop.xlane.xlu0 %897
  %v899 = vsel %vm349, %v879, -inf
  %900 = vmax.xlane.f32.xlu0 %v899
  %v901 = vpop.xlane.xlu0 %900
  %v902 = vsel %vm349, %v880, -inf
  %903 = vmax.xlane.f32.xlu0 %v902
  %v904 = vpop.xlane.xlu0 %903
  %v905 = vsub.f32 %v873, %v883
  %v906 = vsub.f32 %v874, %v886
  %v907 = vsub.f32 %v875, %v889
  %v908 = vsub.f32 %v876, %v892
  %v909 = vsub.f32 %v877, %v895
  %v910 = vsub.f32 %v878, %v898
  %v911 = vsub.f32 %v879, %v901
  %v912 = vsub.f32 %v880, %v904
  %v913 = vmul.f32 %v905, 1.442695
  %v914 = vpow.pop %v913
  %v915 = vmul.f32 %v906, 1.442695
  %v916 = vpow.pop %v915
  %v917 = vmul.f32 %v907, 1.442695
  %v918 = vpow.pop %v917
  %v919 = vmul.f32 %v908, 1.442695
  %v920 = vpow.pop %v919
  %v921 = vmul.f32 %v909, 1.442695
  %v922 = vpow.pop %v921
  %v923 = vmul.f32 %v910, 1.442695
  %v924 = vpow.pop %v923
  %v925 = vmul.f32 %v911, 1.442695
  %v926 = vpow.pop %v925
  %v927 = vmul.f32 %v912, 1.442695
  %v928 = vpow.pop %v927
  %v929 = vsel %vm349, %v914, 0.0
  %930 = vadd.xlane.f32.xlu0 %v929
  %v931 = vpop.xlane.xlu0 %930
  %v932 = vsel %vm349, %v916, 0.0
  %933 = vadd.xlane.f32.xlu0 %v932
  %v934 = vpop.xlane.xlu0 %933
  %v935 = vsel %vm349, %v918, 0.0
  %936 = vadd.xlane.f32.xlu0 %v935
  %v937 = vpop.xlane.xlu0 %936
  %v938 = vsel %vm349, %v920, 0.0
  %939 = vadd.xlane.f32.xlu0 %v938
  %v940 = vpop.xlane.xlu0 %939
  %v941 = vsel %vm349, %v922, 0.0
  %942 = vadd.xlane.f32.xlu0 %v941
  %v943 = vpop.xlane.xlu0 %942
  %v944 = vsel %vm349, %v924, 0.0
  %945 = vadd.xlane.f32.xlu0 %v944
  %v946 = vpop.xlane.xlu0 %945
  %v947 = vsel %vm349, %v926, 0.0
  %948 = vadd.xlane.f32.xlu0 %v947
  %v949 = vpop.xlane.xlu0 %948
  %v950 = vsel %vm349, %v928, 0.0
  %951 = vadd.xlane.f32.xlu0 %v950
  %v952 = vpop.xlane.xlu0 %951
  %v953 = vrcp.pop %v931
  %v954 = vmul.f32 %v914, %v953
  %v955 = vrcp.pop %v934
  %v956 = vmul.f32 %v916, %v955
  %v957 = vrcp.pop %v937
  %v958 = vmul.f32 %v918, %v957
  %v959 = vrcp.pop %v940
  %v960 = vmul.f32 %v920, %v959
  %v961 = vrcp.pop %v943
  %v962 = vmul.f32 %v922, %v961
  %v963 = vrcp.pop %v946
  %v964 = vmul.f32 %v924, %v963
  %v965 = vrcp.pop %v949
  %v966 = vmul.f32 %v926, %v965
  %v967 = vrcp.pop %v952
  %v968 = vmul.f32 %v928, %v967
  %v969 = vlaneseq
  %v970 = vshrl.u32 %v969, 7
  %v971 = vsub.s32 2, %v970
  %v972 = vrot.slane %v579, %v971
  %v974 = vsel %vm349, %v954, 0
  %v977 = vsel %vm349, %v956, 0
  %v980 = vsel %vm349, %v958, 0
  %v983 = vsel %vm349, %v960, 0
  %v986 = vsel %vm349, %v962, 0
  %v989 = vsel %vm349, %v964, 0
  %v992 = vsel %vm349, %v966, 0
  %v995 = vsel %vm349, %v968, 0
  %997 = vmatprep.subr.mxu0 0.0
  %998 = vmatpush1.msra.mxu0 %v673
  %999 = vmatprep.subr.mxu0 0.0
  %1000 = vmatpush1.msra.mxu0 %v678
  %1001 = vmatprep.subr.mxu0 0.0
  %1002 = vmatpush1.msra.mxu0 %v683
  %1003 = vmatprep.subr.mxu0 0.0
  %1004 = vmatpush1.msra.mxu0 %v688
  %1005 = vmatprep.subr.mxu0 0.0
  %1006 = vmatpush1.msra.mxu0 %v693
  %1007 = vmatprep.subr.mxu0 0.0
  %1008 = vmatpush1.msra.mxu0 %v698
  %1009 = vmatprep.subr.mxu0 0.0
  %1010 = vmatpush1.msra.mxu0 %v703
  %1011 = vmatprep.subr.mxu0 0.0
  %1012 = vmatpush1.msra.mxu0 %v708
  %1013 = vmatprep.subr.mxu0 0.0
  %1014 = vmatpush1.msra.mxu0 0.0
  %1015 = vmatprep.subr.mxu0 0.0
  %1016 = vmatpush1.msra.mxu0 0.0
  %1017 = vmatprep.subr.mxu0 0.0
  %1018 = vmatpush1.msra.mxu0 0.0
  %1019 = vmatprep.subr.mxu0 0.0
  %1020 = vmatpush1.msra.mxu0 0.0
  %1021 = vmatprep.subr.mxu0 0.0
  %1022 = vmatpush1.msra.mxu0 0.0
  %1023 = vmatprep.subr.mxu0 0.0
  %1024 = vmatpush1.msra.mxu0 0.0
  %1025 = vmatprep.subr.mxu0 0.0
  %1026 = vmatpush1.msra.mxu0 0.0
  %1027 = vmatprep.subr.mxu0 0.0
  %1028 = vmatpush1.msra.mxu0 0.0
  %1029 = vmatprep.subr.mxu0 0.0
  %1030 = vmatpush1.msra.mxu0 0.0
  %1031 = vmatprep.subr.mxu0 0.0
  %1032 = vmatpush1.msra.mxu0 0.0
  %1033 = vmatprep.subr.mxu0 0.0
  %1034 = vmatpush1.msra.mxu0 0.0
  %1035 = vmatprep.subr.mxu0 0.0
  %1036 = vmatpush1.msra.mxu0 0.0
  %1037 = vmatprep.subr.mxu0 0.0
  %1038 = vmatpush1.msra.mxu0 0.0
  %1039 = vmatprep.subr.mxu0 0.0
  %1040 = vmatpush1.msra.mxu0 0.0
  %1041 = vmatprep.subr.mxu0 0.0
  %1042 = vmatpush1.msra.mxu0 0.0
  %1043 = vmatprep.subr.mxu0 0.0
  %1044 = vmatpush1.msra.mxu0 0.0
  %1045 = vmatprep.subr.mxu0 0.0
  %1046 = vmatpush1.msra.mxu0 0.0
  %1047 = vmatprep.subr.mxu0 0.0
  %1048 = vmatpush1.msra.mxu0 0.0
  %1049 = vmatprep.subr.mxu0 0.0
  %1050 = vmatpush1.msra.mxu0 0.0
  %1051 = vmatprep.subr.mxu0 0.0
  %1052 = vmatpush1.msra.mxu0 0.0
  %1053 = vmatprep.subr.mxu0 0.0
  %1054 = vmatpush1.msra.mxu0 0.0
  %1055 = vmatprep.subr.mxu0 0.0
  %1056 = vmatpush1.msra.mxu0 0.0
  %1057 = vmatprep.subr.mxu0 0.0
  %1058 = vmatpush1.msra.mxu0 0.0
  %1059 = vmatprep.subr.mxu0 0.0
  %1060 = vmatpush1.msra.mxu0 0.0
  %1061 = vmatprep.mubr.f32.mxu0 0.0
  %1062 = vmatmul.mubr.f32.gmra.mrb[0].mxu0 %v974
  %v1063 = vpop.f32.mrb[0].mxu0
  %v1064 = vadd.f32 %v972, %v1063
  %v1065 = vpop.f32.mrb[0].mxu0
  %1066 = vmatprep.mubr.f32.mxu0 0.0
  %1067 = vmatmul.mubr.f32.gmra.mrb[0].mxu0 %v977
  %v1068 = vpop.f32.mrb[0].mxu0
  %v1069 = vadd.f32 %v972, %v1068
  %v1070 = vpop.f32.mrb[0].mxu0
  %1071 = vmatprep.mubr.f32.mxu0 0.0
  %1072 = vmatmul.mubr.f32.gmra.mrb[0].mxu0 %v980
  %v1073 = vpop.f32.mrb[0].mxu0
  %v1074 = vadd.f32 %v972, %v1073
  %v1075 = vpop.f32.mrb[0].mxu0
  %1076 = vmatprep.mubr.f32.mxu0 0.0
  %1077 = vmatmul.mubr.f32.gmra.mrb[0].mxu0 %v983
  %v1078 = vpop.f32.mrb[0].mxu0
  %v1079 = vadd.f32 %v972, %v1078
  %v1080 = vpop.f32.mrb[0].mxu0
  %1081 = vmatprep.mubr.f32.mxu0 0.0
  %1082 = vmatmul.mubr.f32.gmra.mrb[0].mxu0 %v986
  %v1083 = vpop.f32.mrb[0].mxu0
  %v1084 = vadd.f32 %v972, %v1083
  %v1085 = vpop.f32.mrb[0].mxu0
  %1086 = vmatprep.mubr.f32.mxu0 0.0
  %1087 = vmatmul.mubr.f32.gmra.mrb[0].mxu0 %v989
  %v1088 = vpop.f32.mrb[0].mxu0
  %v1089 = vadd.f32 %v972, %v1088
  %v1090 = vpop.f32.mrb[0].mxu0
  %1091 = vmatprep.mubr.f32.mxu0 0.0
  %1092 = vmatmul.mubr.f32.gmra.mrb[0].mxu0 %v992
  %v1093 = vpop.f32.mrb[0].mxu0
  %v1094 = vadd.f32 %v972, %v1093
  %v1095 = vpop.f32.mrb[0].mxu0
  %1096 = vmatprep.mubr.f32.mxu0 0.0
  %1097 = vmatmul.mubr.f32.gmra.mrb[0].mxu0 %v995
  %v1098 = vpop.f32.mrb[0].mxu0
  %v1099 = vadd.f32 %v972, %v1098
  %v1100 = vpop.f32.mrb[0].mxu0
  %1101 = vdwg.mxu0
  %v1102 = vsel %vm723, %v1064, -inf
  %1103 = vmax.xlane.f32.xlu0 %v1102
  %v1104 = vpop.xlane.xlu0 %1103
  %v1105 = vsel %vm723, %v1069, -inf
  %1106 = vmax.xlane.f32.xlu0 %v1105
  %v1107 = vpop.xlane.xlu0 %1106
  %v1108 = vsel %vm723, %v1074, -inf
  %1109 = vmax.xlane.f32.xlu0 %v1108
  %v1110 = vpop.xlane.xlu0 %1109
  %v1111 = vsel %vm723, %v1079, -inf
  %1112 = vmax.xlane.f32.xlu0 %v1111
  %v1113 = vpop.xlane.xlu0 %1112
  %v1114 = vsel %vm723, %v1084, -inf
  %1115 = vmax.xlane.f32.xlu0 %v1114
  %v1116 = vpop.xlane.xlu0 %1115
  %v1117 = vsel %vm723, %v1089, -inf
  %1118 = vmax.xlane.f32.xlu0 %v1117
  %v1119 = vpop.xlane.xlu0 %1118
  %v1120 = vsel %vm723, %v1094, -inf
  %1121 = vmax.xlane.f32.xlu0 %v1120
  %v1122 = vpop.xlane.xlu0 %1121
  %v1123 = vsel %vm723, %v1099, -inf
  %1124 = vmax.xlane.f32.xlu0 %v1123
  %v1125 = vpop.xlane.xlu0 %1124
  %v1126 = vsub.f32 %v1064, %v1104
  %v1127 = vsub.f32 %v1069, %v1107
  %v1128 = vsub.f32 %v1074, %v1110
  %v1129 = vsub.f32 %v1079, %v1113
  %v1130 = vsub.f32 %v1084, %v1116
  %v1131 = vsub.f32 %v1089, %v1119
  %v1132 = vsub.f32 %v1094, %v1122
  %v1133 = vsub.f32 %v1099, %v1125
  %v1134 = vmul.f32 %v1126, 1.442695
  %v1135 = vpow.pop %v1134
  %v1136 = vmul.f32 %v1127, 1.442695
  %v1137 = vpow.pop %v1136
  %v1138 = vmul.f32 %v1128, 1.442695
  %v1139 = vpow.pop %v1138
  %v1140 = vmul.f32 %v1129, 1.442695
  %v1141 = vpow.pop %v1140
  %v1142 = vmul.f32 %v1130, 1.442695
  %v1143 = vpow.pop %v1142
  %v1144 = vmul.f32 %v1131, 1.442695
  %v1145 = vpow.pop %v1144
  %v1146 = vmul.f32 %v1132, 1.442695
  %v1147 = vpow.pop %v1146
  %v1148 = vmul.f32 %v1133, 1.442695
  %v1149 = vpow.pop %v1148
  %v1150 = vsel %vm723, %v1135, 0.0
  %1151 = vadd.xlane.f32.xlu0 %v1150
  %v1152 = vpop.xlane.xlu0 %1151
  %v1153 = vsel %vm723, %v1137, 0.0
  %1154 = vadd.xlane.f32.xlu0 %v1153
  %v1155 = vpop.xlane.xlu0 %1154
  %v1156 = vsel %vm723, %v1139, 0.0
  %1157 = vadd.xlane.f32.xlu0 %v1156
  %v1158 = vpop.xlane.xlu0 %1157
  %v1159 = vsel %vm723, %v1141, 0.0
  %1160 = vadd.xlane.f32.xlu0 %v1159
  %v1161 = vpop.xlane.xlu0 %1160
  %v1162 = vsel %vm723, %v1143, 0.0
  %1163 = vadd.xlane.f32.xlu0 %v1162
  %v1164 = vpop.xlane.xlu0 %1163
  %v1165 = vsel %vm723, %v1145, 0.0
  %1166 = vadd.xlane.f32.xlu0 %v1165
  %v1167 = vpop.xlane.xlu0 %1166
  %v1168 = vsel %vm723, %v1147, 0.0
  %1169 = vadd.xlane.f32.xlu0 %v1168
  %v1170 = vpop.xlane.xlu0 %1169
  %v1171 = vsel %vm723, %v1149, 0.0
  %1172 = vadd.xlane.f32.xlu0 %v1171
  %v1173 = vpop.xlane.xlu0 %1172
  %v1174 = vlog2.pop %v1152
  %v1175 = vmul.f32 %v1174, 0.6931472
  %v1176 = vlog2.pop %v1155
  %v1177 = vmul.f32 %v1176, 0.6931472
  %v1178 = vlog2.pop %v1158
  %v1179 = vmul.f32 %v1178, 0.6931472
  %v1180 = vlog2.pop %v1161
  %v1181 = vmul.f32 %v1180, 0.6931472
  %v1182 = vlog2.pop %v1164
  %v1183 = vmul.f32 %v1182, 0.6931472
  %v1184 = vlog2.pop %v1167
  %v1185 = vmul.f32 %v1184, 0.6931472
  %v1186 = vlog2.pop %v1170
  %v1187 = vmul.f32 %v1186, 0.6931472
  %v1188 = vlog2.pop %v1173
  %v1189 = vmul.f32 %v1188, 0.6931472
  %v1190 = vsub.f32 %v1126, %v1175
  %v1191 = vsub.f32 %v1127, %v1177
  %v1192 = vsub.f32 %v1128, %v1179
  %v1193 = vsub.f32 %v1129, %v1181
  %v1194 = vsub.f32 %v1130, %v1183
  %v1195 = vsub.f32 %v1131, %v1185
  %v1196 = vsub.f32 %v1132, %v1187
  %v1197 = vsub.f32 %v1133, %v1189
  %1198 = vst.msk [vmem:[%s6] sm:$0xff] %vm723, %v1190
  %1199 = vst.msk [vmem:[%s6 + $0x8] sm:$0xff] %vm723, %v1191
  %1200 = vst.msk [vmem:[%s6 + $0x10] sm:$0xff] %vm723, %v1192
  %1201 = vst.msk [vmem:[%s6 + $0x18] sm:$0xff] %vm723, %v1193
  %1202 = vst.msk [vmem:[%s6 + $0x20] sm:$0xff] %vm723, %v1194
  %1203 = vst.msk [vmem:[%s6 + $0x28] sm:$0xff] %vm723, %v1195
  %1204 = vst.msk [vmem:[%s6 + $0x30] sm:$0xff] %vm723, %v1196
  %1205 = vst.msk [vmem:[%s6 + $0x38] sm:$0xff] %vm723, %v1197
  // Predicated region
  $region26: #{tpu_custom_call.1} parent=0 // pred_check
    _
  $region27: #{tpu_custom_call.1} parent=0 // pred_check_branch
    %1207 = sbr.rel (0) target = $region29
  $region28: #{tpu_custom_call.1} parent=0 // pred_region
    _
  $region29: #{tpu_custom_call.1} parent=0 // pred_fallthru
    _
  // Predicated region
  $region30: #{tpu_custom_call.1} parent=0 // pred_check
    _
  $region31: #{tpu_custom_call.1} parent=0 // pred_check_branch
    %1209 = sbr.rel (0) target = $region33
  $region32: #{tpu_custom_call.1} parent=0 // pred_region
    _
  $region33: #{tpu_custom_call.1} parent=0 // pred_fallthru
    _

</llo_original>
